<compile_context>
chip_gen: v6e
topology: v6e:2x2x1
jax: 0.10.0
libtpu: 0.0.40
codegen_flags: <defaults>
</compile_context>

<pallas_src>
import functools
import random

import jax
import jax.numpy as jnp
from jax.experimental import pallas as pl
from jax.experimental.pallas import tpu as pltpu


def _round_up(n, m):
    return ((n + m - 1) // m) * m


def _cls_add_kernel(x_ref, cls_ref, o_ref):
    # (bt, Hb) + (1, Hb): sublane-broadcast add on the VPU.  cls is zero-padded
    # past the true hidden size, so any pass-through columns are unchanged.
    o_ref[...] = x_ref[...] + cls_ref[...]


def _choose_tiles(B, S, H, itemsize):
    """Batch tile + lane-aligned block width, sized from the padded footprint."""
    sub = max(8, 32 // itemsize)            # sublane packing: f32->8, bf16->16, i8->32
    h_blk = min(_round_up(H, 128), S * H)   # lane-dense block width (or full row)
    per_row = h_blk * itemsize
    budget = 8 << 20                        # fits default scoped VMEM on v5e/v6e/v7x
    cap = max(sub, ((budget // (4 * per_row)) // sub) * sub)   # 2x in + 2x out buffers
    bt = min(B, cap)
    # Give the v7x megacore at least two independent batch tiles when the batch
    # is big enough to keep every tile sublane-aligned.
    if bt == B and B >= 2 * sub:
        bt = _round_up((B + 1) // 2, sub)
    return bt, h_blk


@functools.partial(jax.jit, static_argnums=(2, 3), donate_argnums=(0,))
def _cls_add_pallas(x, cls_pad, bt, h_blk):
    B, S, H = x.shape
    x2d = x.reshape(B, S * H)               # contiguous reshape -> bitcast under jit

    out2d = pl.pallas_call(
        _cls_add_kernel,
        out_shape=jax.ShapeDtypeStruct(x2d.shape, x2d.dtype),
        grid=(pl.cdiv(B, bt),),
        in_specs=[
            pl.BlockSpec((bt, h_blk), lambda i: (i, 0)),   # CLS columns only
            pl.BlockSpec((1, h_blk), lambda i: (0, 0)),    # cls row, VMEM-resident
        ],
        out_specs=pl.BlockSpec((bt, h_blk), lambda i: (i, 0)),
        input_output_aliases={0: 0},         # in place: untouched columns preserved
        compiler_params=pltpu.CompilerParams(
            dimension_semantics=("parallel",),
        ),
    )(x2d, cls_pad)

    return out2d.reshape(B, S, H)


@functools.partial(jax.jit, donate_argnums=(0,))
def _cls_add_xla(x, cls_vec):
    # Fast path for tiny CLS slices: a donated in-place dynamic-update-slice is
    # cheaper than paying kernel launch + DMA-descriptor latency for a few KB.
    return x.at[:, 0, :].add(cls_vec)


def cls_embedding(x, cls_vec, drop_probability=0.0, *, min_kernel_bytes=64 << 10):
    """Functional equivalent of CLSEmbedding.forward.

    x:       (B, S, H).  NOTE: on the "add" branch x is donated (updated in
             place); callers must not reuse the original array afterwards.
             The "drop" branch returns x unchanged (no donation).
    cls_vec: (H,)
    """
    # Host-side stochastic gate, mirroring the PyTorch module (Python RNG at
    # call time, not traced).
    # TODO(synk): under an outer jax.jit this branch is frozen at trace time,
    # so the per-call stochastic drop of the PyTorch module is not reproduced
    # there; it also makes buffer ownership differ between the two branches.
    if not (random.random() > drop_probability):
        return x

    B, S, H = x.shape
    itemsize = jnp.dtype(x.dtype).itemsize
    cls_vec = jnp.asarray(cls_vec, dtype=x.dtype).reshape(H)

    if B * H * itemsize < min_kernel_bytes:
        return _cls_add_xla(x, cls_vec)

    bt, h_blk = _choose_tiles(B, S, H, itemsize)
    cls_pad = jnp.zeros((1, h_blk), dtype=x.dtype).at[0, :H].set(cls_vec)
    return _cls_add_pallas(x, cls_pad, bt, h_blk)


if __name__ == "__main__":
    random.seed(0)  # make the (always-on at p=0.0) host-side gate deterministic

    # Small shapes implied by the forward: batch=2, seq=8, hidden=32.
    B, S, H = 2, 8, 32
    key = jax.random.PRNGKey(0)
    kx, kz = jax.random.split(key)

    x = jax.random.normal(kx, (B, S, H), dtype=jnp.float32)
    cls_vec = jax.random.normal(kz, (H,), dtype=jnp.float32)

    # Reference is computed BEFORE the kernel call because x is donated/aliased
    # into the kernel output.
    ref = jax.block_until_ready(x.at[:, 0, :].add(cls_vec))

    # Force the Pallas path (the default threshold would route this tiny shape
    # to the plain-XLA fast path).
    out = cls_embedding(x, cls_vec, drop_probability=0.0, min_kernel_bytes=0)
    out = jax.block_until_ready(out)

    assert out.shape == (B, S, H)
    assert jnp.allclose(out, ref, atol=1e-6), "mismatch vs reference"
    print("KERNEL_OK")
</pallas_src>

<mosaic_0001>
module attributes {stable_mosaic.version = 11 : i64} {
  func.func @_cls_add_kernel(%arg0: i32, %arg1: memref<2x128xf32, #tpu.memory_space<vmem>>, %arg2: memref<1x128xf32, #tpu.memory_space<vmem>>, %arg3: memref<2x128xf32, #tpu.memory_space<vmem>>) attributes {dimension_semantics = [#tpu.dimension_semantics<parallel>], iteration_bounds = array<i64: 1>, scalar_prefetch = 0 : i64, scratch_operands = 0 : i64, tpu.core_type = #tpu.core_type<tc>, window_params = [{transform_indices = @transform_0, window_bounds = array<i64: 2, 128>}, {pipeline_mode = #tpu.pipeline_mode<synchronous>, transform_indices = @transform_1, window_bounds = array<i64: 1, 128>}, {transform_indices = @transform_2, window_bounds = array<i64: 2, 128>}]} {
    %c0 = arith.constant 0 : index
    %c0_0 = arith.constant 0 : index
    %0 = vector.load %arg1[%c0, %c0_0] : memref<2x128xf32, #tpu.memory_space<vmem>>, vector<2x128xf32>
    %c0_1 = arith.constant 0 : index
    %c0_2 = arith.constant 0 : index
    %1 = vector.load %arg2[%c0_1, %c0_2] : memref<1x128xf32, #tpu.memory_space<vmem>>, vector<1x128xf32>
    %2 = vector.broadcast %1 : vector<1x128xf32> to vector<2x128xf32>
    %3 = arith.addf %0, %2 : vector<2x128xf32>
    %c0_3 = arith.constant 0 : index
    %c0_4 = arith.constant 0 : index
    %4 = vector.load %arg3[%c0_3, %c0_4] : memref<2x128xf32, #tpu.memory_space<vmem>>, vector<2x128xf32>
    tpu.vector_store %arg3[%c0_3, %c0_4], %3 {strides = array<i32>} : memref<2x128xf32, #tpu.memory_space<vmem>>, vector<2x128xf32>,
    return
  }
  func.func @transform_0(%arg0: i32) -> (i32, i32) {
    %c0_i32 = arith.constant 0 : i32
    %c0_i32_0 = arith.constant 0 : i32
    return %arg0, %c0_i32 : i32, i32
  }
  func.func @transform_1(%arg0: i32) -> (i32, i32) {
    %c0_i32 = arith.constant 0 : i32
    %c0_i32_0 = arith.constant 0 : i32
    %c0_i32_1 = arith.constant 0 : i32
    return %c0_i32, %c0_i32_0 : i32, i32
  }
  func.func @transform_2(%arg0: i32) -> (i32, i32) {
    %c0_i32 = arith.constant 0 : i32
    %c0_i32_0 = arith.constant 0 : i32
    return %arg0, %c0_i32 : i32, i32
  }
}

</mosaic_0001>

<llo_original>
// kernel: _cls_add_pallas.1
$region0: #{_cls_add_pallas.1}
  #allocation0 [shape = 'u32[]', space=smem, size = 0x4, offset = 0x4, fixed_abs, tag = 'smem constant byte address 0x4 - core index']
  #allocation1 [shape = 'u32[144,128]{1,0:T(1,128)}', space=vmem, size = 0x12000, scoped, tag = 'internal scratch']
  %s0 = inlined_call_operand.vmem [shape: f32[2,256], index: 0, kind: input, shape index: {}, may-alias: {0,2}]
  %s1 = inlined_call_operand.vmem [shape: f32[1,128], index: 1, kind: input, shape index: {}]
  %s2 = inlined_call_operand.vmem [shape: f32[2,256], index: 2, kind: output, shape index: {}, may-alias: {0,2}]
  %s3 = sld [smem:[#allocation0]]
  $region18: #{_cls_add_pallas.1} parent=0
    _
  %s5 = ssub.s32 1, %s3
  %s6 = scalar_select 0, %s5, %s3
  // Predicated region
  $region2: #{_cls_add_pallas.1} parent=0 // pred_check
    _
  $region3: #{_cls_add_pallas.1} parent=0 // pred_check_branch
    %8 = sbr.rel (0) target = $region5
  $region4: #{_cls_add_pallas.1} parent=0 // pred_region
    _
  $region5: #{_cls_add_pallas.1} parent=0 // pred_fallthru
    _
  // Predicated region
  $region6: #{_cls_add_pallas.1} parent=0 // pred_check
    _
  $region7: #{_cls_add_pallas.1} parent=0 // pred_check_branch
    %10 = sbr.rel (0) target = $region9
  $region8: #{_cls_add_pallas.1} parent=0 // pred_region
    _
  $region9: #{_cls_add_pallas.1} parent=0 // pred_fallthru
    _
  %v11 = vld [vmem:[%s0] sm:$0x3]
  %v12 = vld [vmem:[%s1] sm:$0x1]
  %v14 = vlaneseq
  %v15 = vshrl.u32 %v14, 7
  %v16 = vsub.s32 0, %v15
  %v17 = vrot.slane %v12, %v16
  %v19 = vadd.f32 %v11, %v17
  %20 = vst [vmem:[%s2] sm:$0x3] %v19
  // Predicated region
  $region10: #{_cls_add_pallas.1} parent=0 // pred_check
    _
  $region11: #{_cls_add_pallas.1} parent=0 // pred_check_branch
    %22 = sbr.rel (0) target = $region13
  $region12: #{_cls_add_pallas.1} parent=0 // pred_region
    _
  $region13: #{_cls_add_pallas.1} parent=0 // pred_fallthru
    _
  // Predicated region
  $region14: #{_cls_add_pallas.1} parent=0 // pred_check
    _
  $region15: #{_cls_add_pallas.1} parent=0 // pred_check_branch
    %24 = sbr.rel (0) target = $region17
  $region16: #{_cls_add_pallas.1} parent=0 // pred_region
    _
  $region17: #{_cls_add_pallas.1} parent=0 // pred_fallthru
    _

</llo_original>
